<compile_context>
chip_gen: v5e
topology: v5e:2x2
jax: 0.10.0
libtpu: 0.0.40
codegen_flags: <defaults>
</compile_context>

<pallas_src>
import functools

import jax
import jax.numpy as jnp
from jax.experimental import pallas as pl
from jax.experimental.pallas import tpu as pltpu


def _round_up(x, m):
    return (x + m - 1) // m * m


def _prop_predictor_kernel(first_tile_ref, last_tile_ref,
                           starts_ref, lengths_ref, atom_ref,
                           w1_ref, b1_ref, w2_ref, b2_ref,
                           out_ref, acc_ref, *, agg_func):
    """Grid = (M_tiles, N_tiles); N (atoms) is the reduction axis."""
    i = pl.program_id(0)
    j = pl.program_id(1)
    tm = acc_ref.shape[0]
    tn = atom_ref.shape[0]

    @pl.when(j == 0)
    def _():
        acc_ref[...] = jnp.zeros_like(acc_ref)

    ft = first_tile_ref[i]
    lt = last_tile_ref[i]

    # Only atom tiles intersecting this molecule block contribute; tiles
    # outside [ft, lt] are neither re-fetched (clamped index_map) nor computed.
    @pl.when(jnp.logical_and(j >= ft, j <= lt))
    def _():
        # Build the 0/1 segment tile on the fly (never materialized in HBM).
        col = jax.lax.broadcasted_iota(jnp.int32, (tm, tn), 1) + j * tn
        st = starts_ref[...]                      # [tm, 1] int32
        le = lengths_ref[...]                     # [tm, 1] int32
        mask = (col >= st) & (col < st + le)      # [tm, tn]
        seg = jnp.where(mask, 1.0, 0.0).astype(atom_ref.dtype)  # exact in bf16
        # Partial aggregation: [tm, tn] @ [tn, D], bf16 x bf16 -> f32 acc.
        acc_ref[...] += jnp.dot(seg, atom_ref[...],
                                preferred_element_type=jnp.float32)

    @pl.when(j == pl.num_programs(1) - 1)
    def _():
        mol_h = acc_ref[...]
        if agg_func == "mean":
            # TODO(synk): PyTorch mean() over an empty scope is NaN; divisor
            # is clamped to 1 so padded / empty molecules stay finite.
            le = lengths_ref[...].astype(jnp.float32)
            mol_h = mol_h / jnp.maximum(le, 1.0)
        # mol_h = ReLU(W_p_h(mol_h))
        h = jnp.dot(mol_h.astype(w1_ref.dtype), w1_ref[...],
                    preferred_element_type=jnp.float32)
        h = jnp.maximum(h + b1_ref[...], 0.0)
        # mol_o = W_p_o(mol_h)   (n_classes lane-padded to 128)
        out = jnp.dot(h.astype(w2_ref.dtype), w2_ref[...],
                      preferred_element_type=jnp.float32) + b2_ref[...]
        out_ref[...] = out.astype(out_ref.dtype)


def prop_predictor_forward(atom_h, scope_starts, scope_lengths, params,
                           agg_func="sum", *, block_m=256, block_n=512):
    """atom_h: [N, D] f32. scope_*: [M] int32. Returns [M, n_classes] f32."""
    if agg_func not in ("sum", "mean"):
        raise ValueError("agg_func must be 'sum' or 'mean'")
    N, D = atom_h.shape
    M = scope_starts.shape[0]
    w1, b1, w2, b2 = params  # w1: [D, H], b1: [1, H], w2: [H, C], b2: [1, C]
    H = w1.shape[1]
    C = w2.shape[1]

    LANE = 128
    tm = min(block_m, _round_up(M, 8))
    tn = min(block_n, _round_up(N, 8))
    Mp = _round_up(M, tm)
    Np = _round_up(N, tn)
    Cp = _round_up(C, LANE)
    gm, gn = Mp // tm, Np // tn

    # bf16 for the streamed bulk data; f32 accumulation on the MXU; biases f32.
    atom_p = jnp.zeros((Np, D), jnp.bfloat16).at[:N].set(
        atom_h.astype(jnp.bfloat16))
    starts_i = scope_starts.astype(jnp.int32)
    lengths_i = scope_lengths.astype(jnp.int32)
    starts_p = jnp.zeros((Mp, 1), jnp.int32).at[:M, 0].set(starts_i)
    lengths_p = jnp.zeros((Mp, 1), jnp.int32).at[:M, 0].set(lengths_i)
    w1_c = w1.astype(jnp.bfloat16)
    b1_c = b1.astype(jnp.float32)
    w2_p = jnp.zeros((H, Cp), jnp.bfloat16).at[:, :C].set(
        w2.astype(jnp.bfloat16))
    b2_p = jnp.zeros((1, Cp), jnp.float32).at[:, :C].set(b2.astype(jnp.float32))

    # Per molecule-block atom-tile range (scalar prefetch -> SMEM).
    BIG = jnp.int32(2 ** 30)
    starts_for_min = jnp.full((Mp,), BIG, jnp.int32).at[:M].set(starts_i)
    ends_for_max = jnp.zeros((Mp,), jnp.int32).at[:M].set(starts_i + lengths_i)
    blk_min_start = starts_for_min.reshape(gm, tm).min(axis=1)
    blk_max_end = ends_for_max.reshape(gm, tm).max(axis=1)
    first_tile = jnp.clip(blk_min_start // tn, 0, gn - 1).astype(jnp.int32)
    last_tile = jnp.clip((jnp.maximum(blk_max_end, 1) - 1) // tn,
                         0, gn - 1).astype(jnp.int32)
    last_tile = jnp.maximum(last_tile, first_tile)

    def _atom_map(i, j, ft, lt):
        # Clamp into this block's live range: out-of-range steps repeat the
        # previous block index, so their DMA is elided by the pipeline.
        return (jnp.minimum(jnp.maximum(j, ft[i]), lt[i]), 0)

    flops = 2 * Mp * Np * D + 2 * Mp * D * H + 2 * Mp * H * Cp
    bytes_accessed = (Np * D * 2           # atom_h (~streamed once: localized)
                      + Mp * 2 * 4         # starts / lengths
                      + D * H * 2 + H * Cp * 2 + (H + Cp) * 4   # weights
                      + Mp * Cp * 4)       # output

    kernel = functools.partial(_prop_predictor_kernel, agg_func=agg_func)

    out_p = pl.pallas_call(
        kernel,
        out_shape=jax.ShapeDtypeStruct((Mp, Cp), jnp.float32),
        grid_spec=pltpu.PrefetchScalarGridSpec(
            num_scalar_prefetch=2,
            grid=(gm, gn),
            in_specs=[
                pl.BlockSpec((tm, 1), lambda i, j, ft, lt: (i, 0)),   # starts
                pl.BlockSpec((tm, 1), lambda i, j, ft, lt: (i, 0)),   # lengths
                pl.BlockSpec((tn, D), _atom_map),                     # atom_h
                pl.BlockSpec((D, H), lambda i, j, ft, lt: (0, 0)),    # W1^T
                pl.BlockSpec((1, H), lambda i, j, ft, lt: (0, 0)),    # b1
                pl.BlockSpec((H, Cp), lambda i, j, ft, lt: (0, 0)),   # W2^T
                pl.BlockSpec((1, Cp), lambda i, j, ft, lt: (0, 0)),   # b2
            ],
            out_specs=pl.BlockSpec((tm, Cp), lambda i, j, ft, lt: (i, 0)),
            scratch_shapes=[pltpu.VMEM((tm, D), jnp.float32)],  # mol_h acc
        ),
        compiler_params=pltpu.CompilerParams(
            dimension_semantics=("parallel", "arbitrary"),
            vmem_limit_bytes=32 * 1024 * 1024),
        cost_estimate=pl.CostEstimate(flops=flops, transcendentals=0,
                                      bytes_accessed=bytes_accessed),
    )(first_tile, last_tile, starts_p, lengths_p, atom_p,
      w1_c, b1_c, w2_p, b2_p)

    return out_p[:M, :C]


def _init_params(key, d_model, hidden_size, n_classes):
    """Synthetic weights matching nn.Linear shapes (stored pre-transposed).

    W_p_h: Linear(d_model -> hidden_size)   -> pass as [d_model, hidden]
    W_p_o: Linear(hidden_size -> n_classes) -> pass as [hidden, n_classes]
    """
    k1, k2, k3, k4 = jax.random.split(key, 4)
    w1_t = jax.random.normal(k1, (d_model, hidden_size), jnp.float32) * 0.1
    b1 = jax.random.normal(k2, (1, hidden_size), jnp.float32) * 0.1
    w2_t = jax.random.normal(k3, (hidden_size, n_classes), jnp.float32) * 0.1
    b2 = jax.random.normal(k4, (1, n_classes), jnp.float32) * 0.1
    return w1_t, b1, w2_t, b2


def _reference(atom_h, scope_starts, scope_lengths, params, agg_func="sum"):
    """Pure-JAX reference mirroring the PyTorch forward.

    Operands are quantized through bf16 (as the kernel streams them) but all
    math is done in f32, so the comparison isolates kernel correctness from
    input quantization.
    """
    w1, b1, w2, b2 = params
    q = lambda x: x.astype(jnp.bfloat16).astype(jnp.float32)
    atom_q, w1_q, w2_q = q(atom_h), q(w1), q(w2)
    mols = []
    for st, le in zip(scope_starts.tolist(), scope_lengths.tolist()):
        cur = atom_q[st:st + le]
        mols.append(cur.sum(axis=0) if agg_func == "sum" else cur.mean(axis=0))
    mol_h = jnp.stack(mols, axis=0)
    h = jnp.maximum(mol_h @ w1_q + b1, 0.0)
    return h @ w2_q + b2


if __name__ == "__main__":
    key = jax.random.PRNGKey(0)
    k_in, k_p = jax.random.split(key)

    # Small shapes implied by the module: atom_h [N_atoms, model.output_size],
    # hidden_size, n_classes=1, and a `scope` of (start, length) per molecule.
    n_atoms = 24
    d_model = 16       # model.output_size
    hidden_size = 32   # args.hidden_size
    n_classes = 1
    agg_func = "sum"   # args.agg_func

    atom_h = jax.random.normal(k_in, (n_atoms, d_model), jnp.float32)
    scope_starts = jnp.array([0, 8, 14], dtype=jnp.int32)
    scope_lengths = jnp.array([8, 6, 10], dtype=jnp.int32)

    params = _init_params(k_p, d_model, hidden_size, n_classes)

    out = prop_predictor_forward(atom_h, scope_starts, scope_lengths, params,
                                 agg_func=agg_func)
    out = jax.block_until_ready(out)

    ref = _reference(atom_h, scope_starts, scope_lengths, params,
                     agg_func=agg_func)
    assert out.shape == (scope_starts.shape[0], n_classes)
    # bf16 streaming + f32 accumulation: allow small quantization slack.
    assert jnp.allclose(out, ref, atol=2e-2, rtol=2e-2), (out, ref)

    print("KERNEL_OK")
</pallas_src>

<mosaic_0001>
module attributes {stable_mosaic.version = 11 : i64} {
  func.func @_prop_predictor_kernel(%arg0: i32, %arg1: i32, %arg2: memref<1xi32, #tpu.memory_space<smem>>, %arg3: memref<1xi32, #tpu.memory_space<smem>>, %arg4: memref<8x1xi32, #tpu.memory_space<vmem>>, %arg5: memref<8x1xi32, #tpu.memory_space<vmem>>, %arg6: memref<24x16xbf16, #tpu.memory_space<vmem>>, %arg7: memref<16x32xbf16, #tpu.memory_space<vmem>>, %arg8: memref<1x32xf32, #tpu.memory_space<vmem>>, %arg9: memref<32x128xbf16, #tpu.memory_space<vmem>>, %arg10: memref<1x128xf32, #tpu.memory_space<vmem>>, %arg11: memref<8x128xf32, #tpu.memory_space<vmem>>, %arg12: memref<8x16xf32, #tpu.memory_space<vmem>>) attributes {dimension_semantics = [#tpu.dimension_semantics<parallel>, #tpu.dimension_semantics<arbitrary>], iteration_bounds = array<i64: 1, 1>, scalar_prefetch = 2 : i64, scratch_operands = 1 : i64, tpu.core_type = #tpu.core_type<tc>, window_params = [{transform_indices = @transform_0, window_bounds = array<i64: 8, 1>}, {transform_indices = @transform_1, window_bounds = array<i64: 8, 1>}, {transform_indices = @transform_2, window_bounds = array<i64: 24, 16>}, {pipeline_mode = #tpu.pipeline_mode<synchronous>, transform_indices = @transform_3, window_bounds = array<i64: 16, 32>}, {pipeline_mode = #tpu.pipeline_mode<synchronous>, transform_indices = @transform_4, window_bounds = array<i64: 1, 32>}, {pipeline_mode = #tpu.pipeline_mode<synchronous>, transform_indices = @transform_5, window_bounds = array<i64: 32, 128>}, {pipeline_mode = #tpu.pipeline_mode<synchronous>, transform_indices = @transform_6, window_bounds = array<i64: 1, 128>}, {transform_indices = @transform_7, window_bounds = array<i64: 8, 128>}]} {
    %c0_i32 = arith.constant 0 : i32
    %0 = arith.cmpi eq, %arg1, %c0_i32 : i32
    %1 = arith.extui %0 : i1 to i32
    %c0_i32_0 = arith.constant 0 : i32
    %2 = arith.cmpi ne, %1, %c0_i32_0 : i32
    scf.if %2 {
      %cst = arith.constant 0.000000e+00 : f32
      %15 = vector.broadcast %cst : f32 to vector<8x16xf32>
      %c0 = arith.constant 0 : index
      %c0_4 = arith.constant 0 : index
      %16 = vector.load %arg12[%c0, %c0_4] : memref<8x16xf32, #tpu.memory_space<vmem>>, vector<8x16xf32>
      tpu.vector_store %arg12[%c0, %c0_4], %15 {strides = array<i32>} : memref<8x16xf32, #tpu.memory_space<vmem>>, vector<8x16xf32>,
    } else {
    }
    %3 = arith.index_cast %arg0 : i32 to index
    %4 = memref.load %arg2[%3] : memref<1xi32, #tpu.memory_space<smem>>
    %5 = arith.index_cast %arg0 : i32 to index
    %6 = memref.load %arg3[%5] : memref<1xi32, #tpu.memory_space<smem>>
    %7 = arith.cmpi sge, %arg1, %4 : i32
    %8 = arith.cmpi sle, %arg1, %6 : i32
    %9 = arith.andi %7, %8 : i1
    %10 = arith.extui %9 : i1 to i32
    %c0_i32_1 = arith.constant 0 : i32
    %11 = arith.cmpi ne, %10, %c0_i32_1 : i32
    scf.if %11 {
      %15 = tpu.iota {dimensions = array<i32: 1>} : vector<8x24xi32>
      %c24_i32 = arith.constant 24 : i32
      %16 = arith.muli %arg1, %c24_i32 : i32
      %17 = vector.broadcast %16 : i32 to vector<8x24xi32>
      %18 = arith.addi %15, %17 : vector<8x24xi32>
      %c0 = arith.constant 0 : index
      %c0_4 = arith.constant 0 : index
      %19 = vector.load %arg4[%c0, %c0_4] : memref<8x1xi32, #tpu.memory_space<vmem>>, vector<8x1xi32>
      %c0_5 = arith.constant 0 : index
      %c0_6 = arith.constant 0 : index
      %20 = vector.load %arg5[%c0_5, %c0_6] : memref<8x1xi32, #tpu.memory_space<vmem>>, vector<8x1xi32>
      %21 = vector.broadcast %19 : vector<8x1xi32> to vector<8x24xi32>
      %22 = arith.cmpi sge, %18, %21 : vector<8x24xi32>
      %23 = arith.addi %19, %20 : vector<8x1xi32>
      %24 = vector.broadcast %23 : vector<8x1xi32> to vector<8x24xi32>
      %25 = arith.cmpi slt, %18, %24 : vector<8x24xi32>
      %26 = arith.andi %22, %25 : vector<8x24xi1>
      %cst = arith.constant 1.000000e+00 : f32
      %cst_7 = arith.constant 0.000000e+00 : f32
      %27 = vector.broadcast %cst : f32 to vector<8x24xf32>
      %28 = vector.broadcast %cst_7 : f32 to vector<8x24xf32>
      %29 = arith.select %26, %27, %28 : vector<8x24xi1>, vector<8x24xf32>
      %30 = arith.truncf %29 : vector<8x24xf32> to vector<8x24xbf16>
      %c0_8 = arith.constant 0 : index
      %c0_9 = arith.constant 0 : index
      %31 = vector.load %arg12[%c0_8, %c0_9] : memref<8x16xf32, #tpu.memory_space<vmem>>, vector<8x16xf32>
      %c0_10 = arith.constant 0 : index
      %c0_11 = arith.constant 0 : index
      %32 = vector.load %arg6[%c0_10, %c0_11] : memref<24x16xbf16, #tpu.memory_space<vmem>>, vector<24x16xbf16>
      %cst_12 = arith.constant dense<0.000000e+00> : vector<8x16xf32>
      %33 = tpu.matmul %30, %32, %cst_12 {dimension_numbers = #tpu.dot_dimension_numbers<[1], [0], [0], [1], [0, 0, 1, 1], [], []>} : vector<8x24xbf16>, vector<24x16xbf16>, vector<8x16xf32> -> vector<8x16xf32>
      %34 = arith.addf %31, %33 : vector<8x16xf32>
      %c0_13 = arith.constant 0 : index
      %c0_14 = arith.constant 0 : index
      %35 = vector.load %arg12[%c0_13, %c0_14] : memref<8x16xf32, #tpu.memory_space<vmem>>, vector<8x16xf32>
      tpu.vector_store %arg12[%c0_13, %c0_14], %34 {strides = array<i32>} : memref<8x16xf32, #tpu.memory_space<vmem>>, vector<8x16xf32>,
    } else {
    }
    %c0_i32_2 = arith.constant 0 : i32
    %12 = arith.cmpi eq, %arg1, %c0_i32_2 : i32
    %13 = arith.extui %12 : i1 to i32
    %c0_i32_3 = arith.constant 0 : i32
    %14 = arith.cmpi ne, %13, %c0_i32_3 : i32
    scf.if %14 {
      %c0 = arith.constant 0 : index
      %c0_4 = arith.constant 0 : index
      %15 = vector.load %arg12[%c0, %c0_4] : memref<8x16xf32, #tpu.memory_space<vmem>>, vector<8x16xf32>
      %16 = arith.truncf %15 : vector<8x16xf32> to vector<8x16xbf16>
      %c0_5 = arith.constant 0 : index
      %c0_6 = arith.constant 0 : index
      %17 = vector.load %arg7[%c0_5, %c0_6] : memref<16x32xbf16, #tpu.memory_space<vmem>>, vector<16x32xbf16>
      %cst = arith.constant dense<0.000000e+00> : vector<8x32xf32>
      %18 = tpu.matmul %16, %17, %cst {dimension_numbers = #tpu.dot_dimension_numbers<[1], [0], [0], [1], [0, 0, 1, 1], [], []>} : vector<8x16xbf16>, vector<16x32xbf16>, vector<8x32xf32> -> vector<8x32xf32>
      %c0_7 = arith.constant 0 : index
      %c0_8 = arith.constant 0 : index
      %19 = vector.load %arg8[%c0_7, %c0_8] : memref<1x32xf32, #tpu.memory_space<vmem>>, vector<1x32xf32>
      %20 = vector.broadcast %19 : vector<1x32xf32> to vector<8x32xf32>
      %21 = arith.addf %18, %20 : vector<8x32xf32>
      %cst_9 = arith.constant 0.000000e+00 : f32
      %22 = vector.broadcast %cst_9 : f32 to vector<8x32xf32>
      %23 = arith.maximumf %21, %22 : vector<8x32xf32>
      %24 = arith.truncf %23 : vector<8x32xf32> to vector<8x32xbf16>
      %c0_10 = arith.constant 0 : index
      %c0_11 = arith.constant 0 : index
      %25 = vector.load %arg9[%c0_10, %c0_11] : memref<32x128xbf16, #tpu.memory_space<vmem>>, vector<32x128xbf16>
      %cst_12 = arith.constant dense<0.000000e+00> : vector<8x128xf32>
      %26 = tpu.matmul %24, %25, %cst_12 {dimension_numbers = #tpu.dot_dimension_numbers<[1], [0], [0], [1], [0, 0, 1, 1], [], []>} : vector<8x32xbf16>, vector<32x128xbf16>, vector<8x128xf32> -> vector<8x128xf32>
      %c0_13 = arith.constant 0 : index
      %c0_14 = arith.constant 0 : index
      %27 = vector.load %arg10[%c0_13, %c0_14] : memref<1x128xf32, #tpu.memory_space<vmem>>, vector<1x128xf32>
      %28 = vector.broadcast %27 : vector<1x128xf32> to vector<8x128xf32>
      %29 = arith.addf %26, %28 : vector<8x128xf32>
      %c0_15 = arith.constant 0 : index
      %c0_16 = arith.constant 0 : index
      %30 = vector.load %arg11[%c0_15, %c0_16] : memref<8x128xf32, #tpu.memory_space<vmem>>, vector<8x128xf32>
      tpu.vector_store %arg11[%c0_15, %c0_16], %29 {strides = array<i32>} : memref<8x128xf32, #tpu.memory_space<vmem>>, vector<8x128xf32>,
    } else {
    }
    return
  }
  func.func @transform_0(%arg0: i32, %arg1: i32, %arg2: memref<1xi32, #tpu.memory_space<smem>>, %arg3: memref<1xi32, #tpu.memory_space<smem>>) -> (i32, i32) {
    %c0_i32 = arith.constant 0 : i32
    %c0_i32_0 = arith.constant 0 : i32
    return %arg0, %c0_i32 : i32, i32
  }
  func.func @transform_1(%arg0: i32, %arg1: i32, %arg2: memref<1xi32, #tpu.memory_space<smem>>, %arg3: memref<1xi32, #tpu.memory_space<smem>>) -> (i32, i32) {
    %c0_i32 = arith.constant 0 : i32
    %c0_i32_0 = arith.constant 0 : i32
    return %arg0, %c0_i32 : i32, i32
  }
  func.func @transform_2(%arg0: i32, %arg1: i32, %arg2: memref<1xi32, #tpu.memory_space<smem>>, %arg3: memref<1xi32, #tpu.memory_space<smem>>) -> (i32, i32) {
    %0 = arith.index_cast %arg0 : i32 to index
    %1 = memref.load %arg2[%0] : memref<1xi32, #tpu.memory_space<smem>>
    %2 = arith.maxsi %arg1, %1 : i32
    %3 = arith.index_cast %arg0 : i32 to index
    %4 = memref.load %arg3[%3] : memref<1xi32, #tpu.memory_space<smem>>
    %5 = arith.minsi %2, %4 : i32
    %c0_i32 = arith.constant 0 : i32
    %c0_i32_0 = arith.constant 0 : i32
    return %5, %c0_i32 : i32, i32
  }
  func.func @transform_3(%arg0: i32, %arg1: i32, %arg2: memref<1xi32, #tpu.memory_space<smem>>, %arg3: memref<1xi32, #tpu.memory_space<smem>>) -> (i32, i32) {
    %c0_i32 = arith.constant 0 : i32
    %c0_i32_0 = arith.constant 0 : i32
    %c0_i32_1 = arith.constant 0 : i32
    return %c0_i32, %c0_i32_0 : i32, i32
  }
  func.func @transform_4(%arg0: i32, %arg1: i32, %arg2: memref<1xi32, #tpu.memory_space<smem>>, %arg3: memref<1xi32, #tpu.memory_space<smem>>) -> (i32, i32) {
    %c0_i32 = arith.constant 0 : i32
    %c0_i32_0 = arith.constant 0 : i32
    %c0_i32_1 = arith.constant 0 : i32
    return %c0_i32, %c0_i32_0 : i32, i32
  }
  func.func @transform_5(%arg0: i32, %arg1: i32, %arg2: memref<1xi32, #tpu.memory_space<smem>>, %arg3: memref<1xi32, #tpu.memory_space<smem>>) -> (i32, i32) {
    %c0_i32 = arith.constant 0 : i32
    %c0_i32_0 = arith.constant 0 : i32
    %c0_i32_1 = arith.constant 0 : i32
    return %c0_i32, %c0_i32_0 : i32, i32
  }
  func.func @transform_6(%arg0: i32, %arg1: i32, %arg2: memref<1xi32, #tpu.memory_space<smem>>, %arg3: memref<1xi32, #tpu.memory_space<smem>>) -> (i32, i32) {
    %c0_i32 = arith.constant 0 : i32
    %c0_i32_0 = arith.constant 0 : i32
    %c0_i32_1 = arith.constant 0 : i32
    return %c0_i32, %c0_i32_0 : i32, i32
  }
  func.func @transform_7(%arg0: i32, %arg1: i32, %arg2: memref<1xi32, #tpu.memory_space<smem>>, %arg3: memref<1xi32, #tpu.memory_space<smem>>) -> (i32, i32) {
    %c0_i32 = arith.constant 0 : i32
    %c0_i32_0 = arith.constant 0 : i32
    return %arg0, %c0_i32 : i32, i32
  }
}

</mosaic_0001>

<llo_original>
// kernel: tpu_custom_call.1
$region0: #{tpu_custom_call.1}
  #allocation0 [shape = 'u32[]', space=smem, size = 0x4, offset = 0x4, fixed_abs, tag = 'smem constant byte address 0x4 - core index']
  #allocation1 [shape = 'u32[72,128]{1,0:T(1,128)}', space=vmem, size = 0x9000, scoped, tag = 'internal scratch']
  #allocation2 [shape = 'f32[8,16]{1,0:T(8,128)}', space=vmem, size = 0x1000, scoped, tag = 'scratch operand']
  #allocation3 [shape = 's32[1]{0}', space=sflag, size = 0x4, scoped, tag = 'scoped memory for tpu_custom_call.1']
  #allocation4 [shape = 's32[1]{0:T(128)S(6)}', space=smem, size = 0x200, scoped, tag = 'prefetched SMEM operand 0']
  #allocation5 [shape = 's32[1]{0:T(128)S(6)}', space=smem, size = 0x200, scoped, tag = 'prefetched SMEM operand 1']
  %s0 = inlined_call_operand.<no memory space> [shape: s32[1], index: 0, kind: input, shape index: {}]
  %s1 = inlined_call_operand.<no memory space> [shape: s32[1], index: 1, kind: input, shape index: {}]
  %s2 = inlined_call_operand.vmem [shape: s32[8,1], index: 2, kind: input, shape index: {}]
  %s3 = inlined_call_operand.vmem [shape: s32[8,1], index: 3, kind: input, shape index: {}]
  %s4 = inlined_call_operand.vmem [shape: bf16[24,16], index: 4, kind: input, shape index: {}]
  %s5 = inlined_call_operand.vmem [shape: bf16[16,32], index: 5, kind: input, shape index: {}]
  %s6 = inlined_call_operand.vmem [shape: f32[1,32], index: 6, kind: input, shape index: {}]
  %s7 = inlined_call_operand.vmem [shape: bf16[32,128], index: 7, kind: input, shape index: {}]
  %s8 = inlined_call_operand.vmem [shape: f32[1,128], index: 8, kind: input, shape index: {}]
  %s9 = inlined_call_operand.hbm [shape: f32[8,128], index: 9, kind: output, shape index: {}]
  %s10 = sld [smem:[#allocation0]]
  $region50: #{tpu_custom_call.1} parent=0
    _
  %s12 = ssub.s32 1, %s10
  %s13 = scalar_select 0, %s12, %s10
  %14 = sst [smem:[#allocation4]] %s0
  %15 = sst [smem:[#allocation5]] %s1
  $region1: #{tpu_custom_call.1} parent=0
    #allocation6 [shape = 'u8[4096]{0}', space=vmem, size = 0x1000, scoped, tag = 'output window, operand 0, single buffered']
    #allocation7 [shape = 's32[1]{0}', space=sflag, size = 0x4, scoped, tag = 'scoped memory for tpu_custom_call.1']
    %16 = vsyncpa [#allocation7], 0
    // Predicated region
    $region2: #{tpu_custom_call.1} parent=1 // pred_check
      _
    $region3: #{tpu_custom_call.1} parent=1 // pred_check_branch
      %18 = sbr.rel (0) target = $region5
    $region4: #{tpu_custom_call.1} parent=1 // pred_region
      _
    $region5: #{tpu_custom_call.1} parent=1 // pred_fallthru
      _
    // Predicated region
    $region6: #{tpu_custom_call.1} parent=1 // pred_check
      _
    $region7: #{tpu_custom_call.1} parent=1 // pred_check_branch
      %20 = sbr.rel (0) target = $region9
    $region8: #{tpu_custom_call.1} parent=1 // pred_region
      _
    $region9: #{tpu_custom_call.1} parent=1 // pred_fallthru
      _
    // Predicated region
    $region10: #{tpu_custom_call.1} parent=1 // pred_check
      _
    $region11: #{tpu_custom_call.1} parent=1 // pred_check_branch
      %22 = sbr.rel (0) target = $region13
    $region12: #{tpu_custom_call.1} parent=1 // pred_region
      %s23 = sld [smem:[#allocation4]]
      %p24 = scmp.gt.s32.totalorder 0, %s23
      %s25 = scalar_select %p24, 0, %s23
      %s26 = sld [smem:[#allocation5]]
      %p27 = scmp.lt.s32.totalorder %s25, %s26
      %s28 = scalar_select %p27, %s25, %s26
      %s29 = smul.u32 3, %s28
      %p30 = scmp.lt.s32.totalorder %s29, 2
      %s31 = scalar_select %p30, %s29, 2
      %s32 = smul.addr %s31, 4
      %s33 = scalar_lea.vmem %s4, %s32
      %s34 = sld [smem:[#allocation4]]
      %p35 = scmp.gt.s32.totalorder 0, %s34
      %s36 = scalar_select %p35, 0, %s34
      %s37 = sld [smem:[#allocation5]]
      %p38 = scmp.lt.s32.totalorder %s36, %s37
      %s39 = scalar_select %p38, %s36, %s37
      %s40 = smul.u32 3, %s39
    $region13: #{tpu_custom_call.1} parent=1 // pred_fallthru
      _
    // Predicated region
    $region14: #{tpu_custom_call.1} parent=1 // pred_check
      _
    $region15: #{tpu_custom_call.1} parent=1 // pred_check_branch
      %42 = sbr.rel (0) target = $region17
    $region16: #{tpu_custom_call.1} parent=1 // pred_region
      _
    $region17: #{tpu_custom_call.1} parent=1 // pred_fallthru
      _
    // Predicated region
    $region18: #{tpu_custom_call.1} parent=1 // pred_check
      _
    $region19: #{tpu_custom_call.1} parent=1 // pred_check_branch
      %44 = sbr.rel (0) target = $region21
    $region20: #{tpu_custom_call.1} parent=1 // pred_region
      _
    $region21: #{tpu_custom_call.1} parent=1 // pred_fallthru
      _
    // Predicated region
    $region22: #{tpu_custom_call.1} parent=1 // pred_check
      _
    $region23: #{tpu_custom_call.1} parent=1 // pred_check_branch
      %46 = sbr.rel (0) target = $region25
    $region24: #{tpu_custom_call.1} parent=1 // pred_region
      _
    $region25: #{tpu_custom_call.1} parent=1 // pred_fallthru
      _
    // Predicated region
    $region26: #{tpu_custom_call.1} parent=1 // pred_check
      _
    $region27: #{tpu_custom_call.1} parent=1 // pred_check_branch
      %48 = sbr.rel (0) target = $region29
    $region28: #{tpu_custom_call.1} parent=1 // pred_region
      _
    $region29: #{tpu_custom_call.1} parent=1 // pred_fallthru
      _
    %s49 = sld [smem:[#allocation4]]
    %p50 = scmp.gt.s32.totalorder 0, %s49
    %s51 = scalar_select %p50, 0, %s49
    %s52 = sld [smem:[#allocation5]]
    %p53 = scmp.lt.s32.totalorder %s51, %s52
    %s54 = scalar_select %p53, %s51, %s52
    %s55 = smul.u32 3, %s54
    %p56 = scmp.lt.s32.totalorder %s55, 2
    %s57 = scalar_select %p56, %s55, 2
    %s58 = smul.addr %s57, 4
    %s59 = scalar_lea.vmem %s4, %s58
    %s60 = sld [smem:[#allocation4]]
    %p61 = scmp.gt.s32.totalorder 0, %s60
    %s62 = scalar_select %p61, 0, %s60
    %s63 = sld [smem:[#allocation5]]
    %p64 = scmp.lt.s32.totalorder %s62, %s63
    %s65 = scalar_select %p64, %s62, %s63
    %s66 = smul.u32 3, %s65
    %p67 = scmp.lt.s32.totalorder %s66, 2
    %s68 = scalar_select %p67, %s66, 2
    %s69 = smul.addr %s68, 4
    %s70 = scalar_lea.vmem %s4, %s69
    %s71 = sld [smem:[#allocation4]]
    %p72 = scmp.gt.s32.totalorder 0, %s71
    %s73 = scalar_select %p72, 0, %s71
    %s74 = sld [smem:[#allocation5]]
    %p75 = scmp.lt.s32.totalorder %s73, %s74
    %s76 = scalar_select %p75, %s73, %s74
    %s77 = smul.u32 3, %s76
    %p79 = scmp.eq.s32.totalorder 0, 0
    // Predicated region
    $region30: #{tpu_custom_call.1} parent=1 // pred_check
      %p80 = pneg %p79
    $region31: #{tpu_custom_call.1} parent=1 // pred_check_branch
      %82 = sbr.rel (%p80) target = $region33
    $region32: #{tpu_custom_call.1} parent=1 // pred_region
      %vm83 = vcmask 130048
      %84 = vst.msk [vmem:[#allocation2] sm:$0xff] %vm83, 0.0
    $region33: #{tpu_custom_call.1} parent=1 // pred_fallthru
      _
    %s85 = sld [smem:[#allocation4]]
    %s86 = sld [smem:[#allocation5]]
    %p87 = scmp.ge.s32.totalorder 0, %s85
    %p88 = scmp.le.s32.totalorder 0, %s86
    %p89 = pnand %p87, %p88
    %p90 = pneg %p89
    // Predicated region
    $region34: #{tpu_custom_call.1} parent=1 // pred_check
      _
    $region35: #{tpu_custom_call.1} parent=1 // pred_check_branch
      %92 = sbr.rel (%p89) target = $region37
    $region36: #{tpu_custom_call.1} parent=1 // pred_region
      %v93 = vlaneseq
      %v94 = vand.u32 %v93, 127
      %s95 = smul.u32 0, 24
      %v96 = vstv %s95
      %v97 = vadd.s32 %v94, %v96
      %v98 = vld [vmem:[%s2] sm:$0xff]
      %v99 = vld [vmem:[%s3] sm:$0xff]
      %100 = vset.pattern.permute.xlu0 0
      %101 = vperm.xlu0 %100, %v98
      %v102 = vpop.permute.xlu0 %101
      %vm103 = vcmp.ge.s32.totalorder %v97, %v102
      %v104 = vadd.s32 %v98, %v99
      %105 = vset.pattern.permute.xlu0 0
      %106 = vperm.xlu0 %105, %v104
      %v107 = vpop.permute.xlu0 %106
      %vm108 = vcmp.lt.s32.totalorder %v97, %v107
      %vm109 = vmand %vm103, %vm108
      %v110 = vsel %vm109, 1.0, 0.0
      %v111 = vpack.c.bf16 %v110, %v110
      %v112 = vld [vmem:[#allocation2] sm:$0xff]
      %v113 = vld [vmem:[%s70] sm:$0xf]
      %v114 = vld [vmem:[%s70 + $0x4] sm:$0xf]
      %v115 = vld [vmem:[%s70 + $0x8] sm:$0xf]
      %v119 = vunpack.c.l.b16 %v113
      %v120 = vunpack.c.l.b16 %v114
      %v121 = vunpack.c.l.b16 %v115
      %v122 = vpack.c.b16 %v120, %v119
      %v123 = vpack.c.b16 %v121, %v121
      %vm125 = vcmask 195584
      %v127 = vsel %vm125, %v111, 0
      %vm129 = vcmask 1043456
      %v131 = vsel %vm129, %v123, 0
      %133 = vmatpush.bf16.msra.mxu0 0
      %134 = vmatpush.bf16.msra.mxu0 0
      %135 = vmatpush.bf16.msra.mxu0 0
      %136 = vmatpush.bf16.msra.mxu0 0
      %137 = vmatpush.bf16.msra.mxu0 0
      %138 = vmatpush.bf16.msra.mxu0 0
      %139 = vmatpush.bf16.msra.mxu0 %v131
      %140 = vmatpush.bf16.msra.mxu0 %v122
      %141 = vmatmul.bf16.gmra.mxu0 %v127
      %v142 = vpop.f32.mrf.mxu0
      %v143 = vadd.f32 0.0, %v142
      %v144 = vpop.f32.mrf.mxu0
      %145 = vdwg.mxu0
      %v146 = vadd.f32 %v112, %v143
      %vm147 = vcmask 130048
      %148 = vst.msk [vmem:[#allocation2] sm:$0xff] %vm147, %v146
    $region37: #{tpu_custom_call.1} parent=1 // pred_fallthru
      _
    // Predicated region
    $region38: #{tpu_custom_call.1} parent=1 // pred_check
      %p149 = pneg %p79
    $region39: #{tpu_custom_call.1} parent=1 // pred_check_branch
      %151 = sbr.rel (%p149) target = $region41
    $region40: #{tpu_custom_call.1} parent=1 // pred_region
      %v152 = vld [vmem:[#allocation2] sm:$0xff]
      %v153 = vpack.c.bf16 %v152, %v152
      %v154 = vld [vmem:[%s5] sm:$0xf]
      %v155 = vld [vmem:[%s5 + $0x4] sm:$0xf]
      %v156 = vld [vmem:[%s6] sm:$0x1]
      %v158 = vperm.slane %v156, 0
      %v162 = vunpack.c.l.b16 %v154
      %v163 = vunpack.c.l.b16 %v155
      %v164 = vpack.c.b16 %v163, %v162
      %vm166 = vcmask 130048
      %v168 = vsel %vm166, %v153, 0
      %170 = vmatpush.bf16.msra.mxu0 0
      %171 = vmatpush.bf16.msra.mxu0 0
      %172 = vmatpush.bf16.msra.mxu0 0
      %173 = vmatpush.bf16.msra.mxu0 0
      %174 = vmatpush.bf16.msra.mxu0 0
      %175 = vmatpush.bf16.msra.mxu0 0
      %176 = vmatpush.bf16.msra.mxu0 0
      %177 = vmatpush.bf16.msra.mxu0 %v164
      %178 = vmatmul.bf16.gmra.mxu0 %v168
      %v179 = vpop.f32.mrf.mxu0
      %v180 = vadd.f32 %v158, %v179
      %v181 = vpop.f32.mrf.mxu0
      %182 = vdwg.mxu0
      %v183 = vmax.f32 %v180, 0.0
      %v184 = vpack.c.bf16 %v183, %v183
      %v185 = vld [vmem:[%s7] sm:$0xf]
      %v186 = vld [vmem:[%s7 + $0x4] sm:$0xf]
      %v187 = vld [vmem:[%s7 + $0x8] sm:$0xf]
      %v188 = vld [vmem:[%s7 + $0xc] sm:$0xf]
      %v189 = vld [vmem:[%s8] sm:$0x1]
      %v191 = vperm.slane %v189, 0
      %v197 = vunpack.c.l.b16 %v185
      %v198 = vunpack.c.l.b16 %v186
      %v199 = vunpack.c.l.b16 %v187
      %v200 = vunpack.c.l.b16 %v188
      %v201 = vpack.c.b16 %v198, %v197
      %v202 = vpack.c.b16 %v200, %v199
      %vm205 = vcmask 261120
      %v207 = vsel %vm205, %v184, 0
      %209 = vmatpush.bf16.msra.mxu0 0
      %210 = vmatpush.bf16.msra.mxu0 0
      %211 = vmatpush.bf16.msra.mxu0 0
      %212 = vmatpush.bf16.msra.mxu0 0
      %213 = vmatpush.bf16.msra.mxu0 0
      %214 = vmatpush.bf16.msra.mxu0 0
      %215 = vmatpush.bf16.msra.mxu0 %v202
      %216 = vmatpush.bf16.msra.mxu0 %v201
      %217 = vmatmul.bf16.gmra.mxu0 %v207
      %v218 = vpop.f32.mrf.mxu0
      %v219 = vadd.f32 %v191, %v218
      %v220 = vpop.f32.mrf.mxu0
      %221 = vdwg.mxu0
      %222 = vst [vmem:[#allocation6] sm:$0xff] %v219
    $region41: #{tpu_custom_call.1} parent=1 // pred_fallthru
      _
    // Predicated region
    $region42: #{tpu_custom_call.1} parent=1 // pred_check
      _
    $region43: #{tpu_custom_call.1} parent=1 // pred_check_branch
      %224 = sbr.rel (0) target = $region45
    $region44: #{tpu_custom_call.1} parent=1 // pred_region
      %226 = vsyncadd [#allocation7], 0
      %s228 = sshll.u32 [#allocation6], 4
      %s229 = int_to_ptr.vmem [resolvable:$true] %s228
      %s230 = sshll.u32 %s9, 4
      %s231 = int_to_ptr.hbm [resolvable:$true] %s230
      %233 = dma.vmem_to_hbm [thread:$0]  %s229, 128, %s231, [#allocation7]
    $region45: #{tpu_custom_call.1} parent=1 // pred_fallthru
      _
    // Predicated region
    $region46: #{tpu_custom_call.1} parent=1 // pred_check
      _
    $region47: #{tpu_custom_call.1} parent=1 // pred_check_branch
      %235 = sbr.rel (0) target = $region49
    $region48: #{tpu_custom_call.1} parent=1 // pred_region
      %237 = dma.done [#allocation7], 128
    $region49: #{tpu_custom_call.1} parent=1 // pred_fallthru
      _
    %238 = vsyncpa [#allocation7], 1

</llo_original>
